<compile_context>
chip_gen: v7x
topology: tpu7x:2x2x1
jax: 0.10.0
libtpu: 0.0.40
codegen_flags: <defaults>
</compile_context>

<pallas_src>
import functools

import jax
import jax.numpy as jnp
from jax import lax
from jax.experimental import pallas as pl
from jax.experimental.pallas import tpu as pltpu


def _round_up(x, m):
    return ((x + m - 1) // m) * m


def _pick_tile_b(B):
    # Prefer >=4 grid steps with 128-512 row tiles (pipeline double-buffering +
    # megacore sharding); else >=2 steps; else the whole batch as one block.
    for cand in (512, 256, 128):
        if B % cand == 0 and B // cand >= 4:
            return cand
    for cand in (256, 128, 64, 32, 16, 8):
        if B % cand == 0 and B // cand >= 2:
            return cand
    return B


def _rodie_kernel(slab_ref, w_big_ref, wp_u_ref, pw_ref, pb_ref,
                  w1_ref, b1_ref, w2_ref, b2_ref, out_ref, *, E, SI, F):
    f32 = jnp.float32
    slab = slab_ref[...]                      # (Bt, K_pad), storage dtype

    # ONE fused MXU pass.  Columns = [pre_u (E) | pre_i (E) | j_tilde_base | pad].
    # RNN biases + delta_u/delta_i terms + predictItem bias ride on the const-1
    # and delta lanes of the slab, so no extra VPU broadcast adds are needed.
    pre = jnp.dot(slab, w_big_ref[...], preferred_element_type=f32)

    # RNN cells: tanh (EUP) + L2 normalize (rsqrt on EUP, mul on VPU).
    h = jnp.tanh(pre[:, :2 * E])
    h_u = h[:, :E]
    h_i = h[:, E:2 * E]
    inv_u = lax.rsqrt(jnp.maximum(jnp.sum(h_u * h_u, axis=1, keepdims=True), 1e-24))
    inv_i = lax.rsqrt(jnp.maximum(jnp.sum(h_i * h_i, axis=1, keepdims=True), 1e-24))
    fut_user = h_u * inv_u
    fut_item = h_i * inv_i

    # projection_operation + its u_proj contribution to j_tilde (the only part
    # of j_tilde that is nonlinear in the slab, hence a second small matmul).
    user = slab[:, E:2 * E].astype(f32)
    du = slab[:, 2 * E + F:2 * E + F + 1].astype(f32)
    u_proj = user * (1.0 + du * pw_ref[...].astype(f32) + pb_ref[...].astype(f32))
    j_tilde = pre[:, 2 * E:2 * E + SI + E] + jnp.dot(
        u_proj, wp_u_ref[...].astype(f32), preferred_element_type=f32)

    # predict_user_state: Linear -> ReLU -> Linear.
    h1 = jnp.maximum(
        jnp.dot(fut_user, w1_ref[...].astype(f32), preferred_element_type=f32)
        + b1_ref[...].astype(f32), 0.0)
    ustate = (jnp.dot(h1, w2_ref[...].astype(f32), preferred_element_type=f32)
              + b2_ref[...].astype(f32))

    # Static lane-slice stores into the packed output slab; pad lanes are never
    # written (and never read by the wrapper).
    od = out_ref.dtype
    out_ref[:, 0:E] = fut_user.astype(od)
    out_ref[:, E:2 * E] = fut_item.astype(od)
    out_ref[:, 2 * E:2 * E + SI + E] = j_tilde.astype(od)
    out_ref[:, 3 * E + SI:3 * E + SI + 2] = ustate.astype(od)


def rodie_forward(params, item, user, ustat, istat, f, delta_u, delta_i,
                  past_dyn, past_stat, *, tile_b=None):
    """RODIE forward. Returns (fut_user, fut_item, U_pred_state, j_tilde, j_true)."""
    B, E = item.shape
    SI = istat.shape[1]
    SU = ustat.shape[1]
    Fdim = f.shape[1]
    sdt = params[0].dtype
    f32 = jnp.float32

    du = delta_u.reshape(B, 1).astype(f32)
    di = delta_i.reshape(B, 1).astype(f32)
    ones = jnp.ones((B, 1), f32)

    # One lane-dense input slab (single dense DMA per tile).
    K_used = 3 * E + Fdim + SI + SU + 3
    K_pad = _round_up(K_used, 128)
    assert params[0].shape[0] == K_pad, "packed weight / input slab K mismatch"
    pieces = [item, user, f, du, di, ones, past_dyn, past_stat, ustat]
    if K_pad > K_used:
        pieces.append(jnp.zeros((B, K_pad - K_used), f32))
    slab = jnp.concatenate(pieces, axis=1).astype(sdt)

    used_w = 3 * E + SI + 2                   # fut_user|fut_item|j_tilde|ustate
    out_w = _round_up(used_w, 128)

    if tile_b is None:
        tile_b = _pick_tile_b(B)
    assert B % tile_b == 0 and (tile_b % 8 == 0 or tile_b == B)

    kernel = functools.partial(_rodie_kernel, E=E, SI=SI, F=Fdim)
    packed = pl.pallas_call(
        kernel,
        out_shape=jax.ShapeDtypeStruct((B, out_w), sdt),
        grid=(B // tile_b,),
        in_specs=[pl.BlockSpec((tile_b, K_pad), lambda i: (i, 0))]
        # Weights: full-array blocks, constant index_map -> resident in VMEM
        # across all grid steps (no per-step re-DMA).
        + [pl.BlockSpec(w.shape, lambda i: (0, 0)) for w in params],
        out_specs=pl.BlockSpec((tile_b, out_w), lambda i: (i, 0)),
        compiler_params=pltpu.CompilerParams(
            dimension_semantics=("parallel",)),   # shards across v7x's 2 TCs
    )(slab, *params)

    fut_user = packed[:, :E]
    fut_item = packed[:, E:2 * E]
    j_tilde = packed[:, 2 * E:2 * E + SI + E]
    ustate = packed[:, 3 * E + SI:3 * E + SI + 2]
    # j_true is pure data movement -> plain XLA outside the kernel.
    j_true = jnp.concatenate([item, istat], axis=1)
    # TODO(synk): if RODIE is driven by a host loop over interactions with tiny
    # per-call batches, move the temporal loop into the kernel (grid over
    # timesteps, scalar-prefetched user/item indices, weights resident in VMEM)
    # to amortize dispatch and weight DMA.
    return fut_user, fut_item, ustate, j_tilde, j_true


def init_raw_params(key, E, Fdim, SU, SI, H):
    """Deterministic synthetic init mirroring the PyTorch module's shapes."""
    ks = jax.random.split(key, 16)
    f32 = jnp.float32

    def nrm(k, shape, std):
        return (jax.random.normal(k, shape) * std).astype(f32)

    def uni(k, shape, bound):
        return jax.random.uniform(k, shape, minval=-bound, maxval=bound).astype(f32)

    # NormalLinear(1, E): normal(0, 1/sqrt(1))
    pw = nrm(ks[0], (E, 1), 1.0)
    pb = nrm(ks[1], (E,), 1.0)

    # predictItem layer: Linear(2E + SI + SU, SI + E)
    in_p, out_p = 2 * E + SI + SU, SI + E
    bp_bound = 1.0 / (in_p ** 0.5)
    Wp = uni(ks[2], (out_p, in_p), bp_bound)
    bp = uni(ks[3], (out_p,), bp_bound)

    # RNNCell(E + 1 + Fdim, E)
    in_r = E + 1 + Fdim
    br = 1.0 / (E ** 0.5)
    u_Wih, u_Whh = uni(ks[4], (E, in_r), br), uni(ks[5], (E, E), br)
    u_bih, u_bhh = uni(ks[6], (E,), br), uni(ks[7], (E,), br)
    i_Wih, i_Whh = uni(ks[8], (E, in_r), br), uni(ks[9], (E, E), br)
    i_bih, i_bhh = uni(ks[10], (E,), br), uni(ks[11], (E,), br)

    # predictStateUser_MLP: Linear(E, H) -> ReLU -> Linear(H, 2)
    b1 = 1.0 / (E ** 0.5)
    W1, bb1 = uni(ks[12], (H, E), b1), uni(ks[13], (H,), b1)
    b2 = 1.0 / (H ** 0.5)
    W2, bb2 = uni(ks[14], (2, H), b2), uni(ks[15], (2,), b2)

    return (pw, pb, Wp, bp, u_Wih, u_Whh, u_bih, u_bhh,
            i_Wih, i_Whh, i_bih, i_bhh, W1, bb1, W2, bb2)


def pack_kernel_params(raw, E, Fdim, SU, SI, H, dtype=jnp.float32):
    """Fuse / pre-transpose weights into kernel layout.

    Returns (W_big, Wp_u, pw, pb, W1, b1, W2, b2).  W_big rows correspond to
    the input-slab lanes [item|user|f|du|di|1|past_dyn|past_stat|ustat|pad] and
    its columns are [pre_u | pre_i | j_tilde_base | pad].
    """
    (pw, pb, Wp, bp, u_Wih, u_Whh, u_bih, u_bhh,
     i_Wih, i_Whh, i_bih, i_bhh, W1, bb1, W2, bb2) = raw

    K_used = 3 * E + Fdim + SI + SU + 3
    K_pad = _round_up(K_used, 128)
    N_used = 3 * E + SI                        # pre_u(E) | pre_i(E) | j_tilde(SI+E)
    N_pad = _round_up(N_used, 128)

    cu = slice(0, E)                           # pre_u columns
    ci = slice(E, 2 * E)                       # pre_i columns
    cj = slice(2 * E, 2 * E + SI + E)          # j_tilde columns

    r_item = 0
    r_user = E
    r_f = 2 * E
    r_du = 2 * E + Fdim
    r_di = r_du + 1
    r_one = r_di + 1
    r_pd = r_one + 1
    r_ps = r_pd + E
    r_us = r_ps + SI

    WpT = Wp.T                                 # rows: [u_proj, past_dyn, past_stat, ustat]

    Wb = jnp.zeros((K_pad, N_pad), jnp.float32)
    Wb = Wb.at[r_item:r_item + E, cu].set(u_Wih[:, :E].T)      # user RNN: x = item
    Wb = Wb.at[r_item:r_item + E, ci].set(i_Whh.T)             # item RNN: h = item
    Wb = Wb.at[r_user:r_user + E, cu].set(u_Whh.T)             # user RNN: h = user
    Wb = Wb.at[r_user:r_user + E, ci].set(i_Wih[:, :E].T)      # item RNN: x = user
    Wb = Wb.at[r_f:r_f + Fdim, cu].set(u_Wih[:, E + 1:].T)
    Wb = Wb.at[r_f:r_f + Fdim, ci].set(i_Wih[:, E + 1:].T)
    Wb = Wb.at[r_du, cu].set(u_Wih[:, E])                      # delta_u column
    Wb = Wb.at[r_di, ci].set(i_Wih[:, E])                      # delta_i column
    Wb = Wb.at[r_one, cu].set(u_bih + u_bhh)                   # biases ride on the
    Wb = Wb.at[r_one, ci].set(i_bih + i_bhh)                   #   constant-1 lane
    Wb = Wb.at[r_one, cj].set(bp)
    Wb = Wb.at[r_pd:r_pd + E, cj].set(WpT[E:2 * E])
    Wb = Wb.at[r_ps:r_ps + SI, cj].set(WpT[2 * E:2 * E + SI])
    Wb = Wb.at[r_us:r_us + SU, cj].set(WpT[2 * E + SI:2 * E + SI + SU])

    Wp_u = WpT[:E]                             # (E, SI+E): u_proj -> j_tilde

    return (Wb.astype(dtype), Wp_u.astype(dtype),
            pw.T.astype(dtype), pb.reshape(1, E).astype(dtype),
            W1.T.astype(dtype), bb1.reshape(1, H).astype(dtype),
            W2.T.astype(dtype), bb2.reshape(1, 2).astype(dtype))


def rodie_reference(raw, item, user, ustat, istat, f, delta_u, delta_i,
                    past_dyn, past_stat):
    """Pure-JAX reference mirroring the PyTorch forward (concat-based)."""
    (pw, pb, Wp, bp, u_Wih, u_Whh, u_bih, u_bhh,
     i_Wih, i_Whh, i_bih, i_bhh, W1, bb1, W2, bb2) = raw
    du = delta_u.reshape(-1, 1)
    di = delta_i.reshape(-1, 1)
    proj = du @ pw.T + pb
    u_proj = user * (1.0 + proj)
    j_tilde = jnp.concatenate([u_proj, past_dyn, past_stat, ustat], axis=1) @ Wp.T + bp
    j_true = jnp.concatenate([item, istat], axis=1)

    def rnn(x, h, Wih, Whh, bih, bhh):
        return jnp.tanh(x @ Wih.T + bih + h @ Whh.T + bhh)

    def l2n(x):
        n = jnp.sqrt(jnp.sum(x * x, axis=1, keepdims=True))
        return x / jnp.maximum(n, 1e-12)

    fut_user = l2n(rnn(jnp.concatenate([item, du, f], axis=1), user,
                       u_Wih, u_Whh, u_bih, u_bhh))
    fut_item = l2n(rnn(jnp.concatenate([user, di, f], axis=1), item,
                       i_Wih, i_Whh, i_bih, i_bhh))
    ustate = jnp.maximum(fut_user @ W1.T + bb1, 0.0) @ W2.T + bb2
    return fut_user, fut_item, ustate, j_tilde, j_true


if __name__ == "__main__":
    # Small, forward-consistent shapes.
    B = 8            # batch of interactions
    E = 32           # embedding_dim
    Fdim = 8         # interaction feature dim (data[:, 8:])
    num_users = 5    # -> static user one-hot dim
    num_items = 6    # -> static item one-hot dim = num_items + 1
    SU = num_users
    SI = num_items + 1
    H = 50           # MLP_h_dim
    # TODO(synk): initial_user_embedding / initial_item_embedding params are
    # unused in forward() and therefore omitted.

    key = jax.random.PRNGKey(0)
    k_par, k_in = jax.random.split(key)
    raw = init_raw_params(k_par, E, Fdim, SU, SI, H)

    ki = jax.random.split(k_in, 9)
    item = jax.random.normal(ki[0], (B, E), dtype=jnp.float32)
    user = jax.random.normal(ki[1], (B, E), dtype=jnp.float32)
    f = jax.random.normal(ki[2], (B, Fdim), dtype=jnp.float32)
    delta_u = jax.random.uniform(ki[3], (B,), dtype=jnp.float32)
    delta_i = jax.random.uniform(ki[4], (B,), dtype=jnp.float32)
    past_dyn = jax.random.normal(ki[5], (B, E), dtype=jnp.float32)
    u_ids = jax.random.randint(ki[6], (B,), 0, SU)
    i_ids = jax.random.randint(ki[7], (B,), 0, SI)
    p_ids = jax.random.randint(ki[8], (B,), 0, SI)
    ustat = jax.nn.one_hot(u_ids, SU, dtype=jnp.float32)
    istat = jax.nn.one_hot(i_ids, SI, dtype=jnp.float32)
    past_stat = jax.nn.one_hot(p_ids, SI, dtype=jnp.float32)

    refs = rodie_reference(raw, item, user, ustat, istat, f,
                           delta_u, delta_i, past_dyn, past_stat)

    # f32 storage (tight check) and bf16 storage (HBM-bound fast path).
    for dtype, tol in ((jnp.float32, 1e-3), (jnp.bfloat16, 2e-2)):
        params = pack_kernel_params(raw, E, Fdim, SU, SI, H, dtype=dtype)
        outs = rodie_forward(params, item, user, ustat, istat, f,
                             delta_u, delta_i, past_dyn, past_stat)
        outs = jax.block_until_ready(outs)
        for o, r in zip(outs, refs):
            assert o.shape == r.shape
            err = jnp.max(jnp.abs(o.astype(jnp.float32) - r.astype(jnp.float32)))
            assert err < tol, f"kernel mismatch ({dtype.__name__}): {err}"

    print("KERNEL_OK")
</pallas_src>

<mosaic_0001>
module attributes {stable_mosaic.version = 11 : i64} {
  func.func @_rodie_kernel(%arg0: i32, %arg1: memref<8x128xf32, #tpu.memory_space<vmem>>, %arg2: memref<128x128xf32, #tpu.memory_space<vmem>>, %arg3: memref<32x39xf32, #tpu.memory_space<vmem>>, %arg4: memref<1x32xf32, #tpu.memory_space<vmem>>, %arg5: memref<1x32xf32, #tpu.memory_space<vmem>>, %arg6: memref<32x50xf32, #tpu.memory_space<vmem>>, %arg7: memref<1x50xf32, #tpu.memory_space<vmem>>, %arg8: memref<50x2xf32, #tpu.memory_space<vmem>>, %arg9: memref<1x2xf32, #tpu.memory_space<vmem>>, %arg10: memref<8x128xf32, #tpu.memory_space<vmem>>) attributes {dimension_semantics = [#tpu.dimension_semantics<parallel>], iteration_bounds = array<i64: 1>, scalar_prefetch = 0 : i64, scratch_operands = 0 : i64, tpu.core_type = #tpu.core_type<tc>, window_params = [{transform_indices = @transform_0, window_bounds = array<i64: 8, 128>}, {pipeline_mode = #tpu.pipeline_mode<synchronous>, transform_indices = @transform_1, window_bounds = array<i64: 128, 128>}, {pipeline_mode = #tpu.pipeline_mode<synchronous>, transform_indices = @transform_2, window_bounds = array<i64: 32, 39>}, {pipeline_mode = #tpu.pipeline_mode<synchronous>, transform_indices = @transform_3, window_bounds = array<i64: 1, 32>}, {pipeline_mode = #tpu.pipeline_mode<synchronous>, transform_indices = @transform_4, window_bounds = array<i64: 1, 32>}, {pipeline_mode = #tpu.pipeline_mode<synchronous>, transform_indices = @transform_5, window_bounds = array<i64: 32, 50>}, {pipeline_mode = #tpu.pipeline_mode<synchronous>, transform_indices = @transform_6, window_bounds = array<i64: 1, 50>}, {pipeline_mode = #tpu.pipeline_mode<synchronous>, transform_indices = @transform_7, window_bounds = array<i64: 50, 2>}, {pipeline_mode = #tpu.pipeline_mode<synchronous>, transform_indices = @transform_8, window_bounds = array<i64: 1, 2>}, {transform_indices = @transform_9, window_bounds = array<i64: 8, 128>}]} {
    %c0 = arith.constant 0 : index
    %c0_0 = arith.constant 0 : index
    %0 = vector.load %arg1[%c0, %c0_0] : memref<8x128xf32, #tpu.memory_space<vmem>>, vector<8x128xf32>
    %c0_1 = arith.constant 0 : index
    %c0_2 = arith.constant 0 : index
    %1 = vector.load %arg2[%c0_1, %c0_2] : memref<128x128xf32, #tpu.memory_space<vmem>>, vector<128x128xf32>
    %cst = arith.constant dense<0.000000e+00> : vector<8x128xf32>
    %2 = tpu.matmul %0, %1, %cst {dimension_numbers = #tpu.dot_dimension_numbers<[1], [0], [0], [1], [0, 0, 1, 1], [], []>} : vector<8x128xf32>, vector<128x128xf32>, vector<8x128xf32> -> vector<8x128xf32>
    %3 = vector.extract_strided_slice %2 {offsets = [0, 0], sizes = [8, 64], strides = [1, 1]} : vector<8x128xf32> to vector<8x64xf32>
    %4 = math.tanh %3 : vector<8x64xf32>
    %5 = vector.extract_strided_slice %4 {offsets = [0, 0], sizes = [8, 32], strides = [1, 1]} : vector<8x64xf32> to vector<8x32xf32>
    %6 = vector.extract_strided_slice %4 {offsets = [0, 32], sizes = [8, 32], strides = [1, 1]} : vector<8x64xf32> to vector<8x32xf32>
    %7 = arith.mulf %5, %5 : vector<8x32xf32>
    %cst_3 = arith.constant dense<0.000000e+00> : vector<8xf32>
    %8 = vector.multi_reduction <add>, %7, %cst_3 [1] : vector<8x32xf32> to vector<8xf32>
    %9 = vector.shape_cast %8 : vector<8xf32> to vector<8x1xf32>
    %cst_4 = arith.constant 1.000000e-24 : f32
    %10 = vector.broadcast %cst_4 : f32 to vector<8x1xf32>
    %11 = arith.maximumf %9, %10 : vector<8x1xf32>
    %12 = math.rsqrt %11 : vector<8x1xf32>
    %13 = arith.mulf %6, %6 : vector<8x32xf32>
    %cst_5 = arith.constant dense<0.000000e+00> : vector<8xf32>
    %14 = vector.multi_reduction <add>, %13, %cst_5 [1] : vector<8x32xf32> to vector<8xf32>
    %15 = vector.shape_cast %14 : vector<8xf32> to vector<8x1xf32>
    %cst_6 = arith.constant 1.000000e-24 : f32
    %16 = vector.broadcast %cst_6 : f32 to vector<8x1xf32>
    %17 = arith.maximumf %15, %16 : vector<8x1xf32>
    %18 = math.rsqrt %17 : vector<8x1xf32>
    %19 = vector.broadcast %12 : vector<8x1xf32> to vector<8x32xf32>
    %20 = arith.mulf %5, %19 : vector<8x32xf32>
    %21 = vector.broadcast %18 : vector<8x1xf32> to vector<8x32xf32>
    %22 = arith.mulf %6, %21 : vector<8x32xf32>
    %23 = vector.extract_strided_slice %0 {offsets = [0, 32], sizes = [8, 32], strides = [1, 1]} : vector<8x128xf32> to vector<8x32xf32>
    %24 = vector.extract_strided_slice %0 {offsets = [0, 72], sizes = [8, 1], strides = [1, 1]} : vector<8x128xf32> to vector<8x1xf32>
    %c0_7 = arith.constant 0 : index
    %c0_8 = arith.constant 0 : index
    %25 = vector.load %arg4[%c0_7, %c0_8] : memref<1x32xf32, #tpu.memory_space<vmem>>, vector<1x32xf32>
    %26 = vector.broadcast %24 : vector<8x1xf32> to vector<8x32xf32>
    %27 = vector.broadcast %25 : vector<1x32xf32> to vector<8x32xf32>
    %28 = arith.mulf %26, %27 : vector<8x32xf32>
    %cst_9 = arith.constant 1.000000e+00 : f32
    %29 = vector.broadcast %cst_9 : f32 to vector<8x32xf32>
    %30 = arith.addf %29, %28 : vector<8x32xf32>
    %c0_10 = arith.constant 0 : index
    %c0_11 = arith.constant 0 : index
    %31 = vector.load %arg5[%c0_10, %c0_11] : memref<1x32xf32, #tpu.memory_space<vmem>>, vector<1x32xf32>
    %32 = vector.broadcast %31 : vector<1x32xf32> to vector<8x32xf32>
    %33 = arith.addf %30, %32 : vector<8x32xf32>
    %34 = arith.mulf %23, %33 : vector<8x32xf32>
    %35 = vector.extract_strided_slice %2 {offsets = [0, 64], sizes = [8, 39], strides = [1, 1]} : vector<8x128xf32> to vector<8x39xf32>
    %c0_12 = arith.constant 0 : index
    %c0_13 = arith.constant 0 : index
    %36 = vector.load %arg3[%c0_12, %c0_13] : memref<32x39xf32, #tpu.memory_space<vmem>>, vector<32x39xf32>
    %cst_14 = arith.constant dense<0.000000e+00> : vector<8x39xf32>
    %37 = tpu.matmul %34, %36, %cst_14 {dimension_numbers = #tpu.dot_dimension_numbers<[1], [0], [0], [1], [0, 0, 1, 1], [], []>} : vector<8x32xf32>, vector<32x39xf32>, vector<8x39xf32> -> vector<8x39xf32>
    %38 = arith.addf %35, %37 : vector<8x39xf32>
    %c0_15 = arith.constant 0 : index
    %c0_16 = arith.constant 0 : index
    %39 = vector.load %arg6[%c0_15, %c0_16] : memref<32x50xf32, #tpu.memory_space<vmem>>, vector<32x50xf32>
    %cst_17 = arith.constant dense<0.000000e+00> : vector<8x50xf32>
    %40 = tpu.matmul %20, %39, %cst_17 {dimension_numbers = #tpu.dot_dimension_numbers<[1], [0], [0], [1], [0, 0, 1, 1], [], []>} : vector<8x32xf32>, vector<32x50xf32>, vector<8x50xf32> -> vector<8x50xf32>
    %c0_18 = arith.constant 0 : index
    %c0_19 = arith.constant 0 : index
    %41 = vector.load %arg7[%c0_18, %c0_19] : memref<1x50xf32, #tpu.memory_space<vmem>>, vector<1x50xf32>
    %42 = vector.broadcast %41 : vector<1x50xf32> to vector<8x50xf32>
    %43 = arith.addf %40, %42 : vector<8x50xf32>
    %cst_20 = arith.constant 0.000000e+00 : f32
    %44 = vector.broadcast %cst_20 : f32 to vector<8x50xf32>
    %45 = arith.maximumf %43, %44 : vector<8x50xf32>
    %c0_21 = arith.constant 0 : index
    %c0_22 = arith.constant 0 : index
    %46 = vector.load %arg8[%c0_21, %c0_22] : memref<50x2xf32, #tpu.memory_space<vmem>>, vector<50x2xf32>
    %cst_23 = arith.constant dense<0.000000e+00> : vector<8x2xf32>
    %47 = tpu.matmul %45, %46, %cst_23 {dimension_numbers = #tpu.dot_dimension_numbers<[1], [0], [0], [1], [0, 0, 1, 1], [], []>} : vector<8x50xf32>, vector<50x2xf32>, vector<8x2xf32> -> vector<8x2xf32>
    %c0_24 = arith.constant 0 : index
    %c0_25 = arith.constant 0 : index
    %48 = vector.load %arg9[%c0_24, %c0_25] : memref<1x2xf32, #tpu.memory_space<vmem>>, vector<1x2xf32>
    %49 = vector.broadcast %48 : vector<1x2xf32> to vector<8x2xf32>
    %50 = arith.addf %47, %49 : vector<8x2xf32>
    %c0_26 = arith.constant 0 : index
    %c0_27 = arith.constant 0 : index
    %51 = vector.load %arg10[%c0_26, %c0_27] : memref<8x128xf32, #tpu.memory_space<vmem>>, vector<8x32xf32>
    tpu.vector_store %arg10[%c0_26, %c0_27], %20 {strides = array<i32>} : memref<8x128xf32, #tpu.memory_space<vmem>>, vector<8x32xf32>,
    %c0_28 = arith.constant 0 : index
    %c32 = arith.constant 32 : index
    %52 = vector.load %arg10[%c0_28, %c32] : memref<8x128xf32, #tpu.memory_space<vmem>>, vector<8x32xf32>
    tpu.vector_store %arg10[%c0_28, %c32], %22 {strides = array<i32>} : memref<8x128xf32, #tpu.memory_space<vmem>>, vector<8x32xf32>,
    %c0_29 = arith.constant 0 : index
    %c64 = arith.constant 64 : index
    %53 = vector.load %arg10[%c0_29, %c64] : memref<8x128xf32, #tpu.memory_space<vmem>>, vector<8x39xf32>
    tpu.vector_store %arg10[%c0_29, %c64], %38 {strides = array<i32>} : memref<8x128xf32, #tpu.memory_space<vmem>>, vector<8x39xf32>,
    %c0_30 = arith.constant 0 : index
    %c103 = arith.constant 103 : index
    %54 = vector.load %arg10[%c0_30, %c103] : memref<8x128xf32, #tpu.memory_space<vmem>>, vector<8x2xf32>
    tpu.vector_store %arg10[%c0_30, %c103], %50 {strides = array<i32>} : memref<8x128xf32, #tpu.memory_space<vmem>>, vector<8x2xf32>,
    return
  }
  func.func @transform_0(%arg0: i32) -> (i32, i32) {
    %c0_i32 = arith.constant 0 : i32
    %c0_i32_0 = arith.constant 0 : i32
    return %arg0, %c0_i32 : i32, i32
  }
  func.func @transform_1(%arg0: i32) -> (i32, i32) {
    %c0_i32 = arith.constant 0 : i32
    %c0_i32_0 = arith.constant 0 : i32
    %c0_i32_1 = arith.constant 0 : i32
    return %c0_i32, %c0_i32_0 : i32, i32
  }
  func.func @transform_2(%arg0: i32) -> (i32, i32) {
    %c0_i32 = arith.constant 0 : i32
    %c0_i32_0 = arith.constant 0 : i32
    %c0_i32_1 = arith.constant 0 : i32
    return %c0_i32, %c0_i32_0 : i32, i32
  }
  func.func @transform_3(%arg0: i32) -> (i32, i32) {
    %c0_i32 = arith.constant 0 : i32
    %c0_i32_0 = arith.constant 0 : i32
    %c0_i32_1 = arith.constant 0 : i32
    return %c0_i32, %c0_i32_0 : i32, i32
  }
  func.func @transform_4(%arg0: i32) -> (i32, i32) {
    %c0_i32 = arith.constant 0 : i32
    %c0_i32_0 = arith.constant 0 : i32
    %c0_i32_1 = arith.constant 0 : i32
    return %c0_i32, %c0_i32_0 : i32, i32
  }
  func.func @transform_5(%arg0: i32) -> (i32, i32) {
    %c0_i32 = arith.constant 0 : i32
    %c0_i32_0 = arith.constant 0 : i32
    %c0_i32_1 = arith.constant 0 : i32
    return %c0_i32, %c0_i32_0 : i32, i32
  }
  func.func @transform_6(%arg0: i32) -> (i32, i32) {
    %c0_i32 = arith.constant 0 : i32
    %c0_i32_0 = arith.constant 0 : i32
    %c0_i32_1 = arith.constant 0 : i32
    return %c0_i32, %c0_i32_0 : i32, i32
  }
  func.func @transform_7(%arg0: i32) -> (i32, i32) {
    %c0_i32 = arith.constant 0 : i32
    %c0_i32_0 = arith.constant 0 : i32
    %c0_i32_1 = arith.constant 0 : i32
    return %c0_i32, %c0_i32_0 : i32, i32
  }
  func.func @transform_8(%arg0: i32) -> (i32, i32) {
    %c0_i32 = arith.constant 0 : i32
    %c0_i32_0 = arith.constant 0 : i32
    %c0_i32_1 = arith.constant 0 : i32
    return %c0_i32, %c0_i32_0 : i32, i32
  }
  func.func @transform_9(%arg0: i32) -> (i32, i32) {
    %c0_i32 = arith.constant 0 : i32
    %c0_i32_0 = arith.constant 0 : i32
    return %arg0, %c0_i32 : i32, i32
  }
}

</mosaic_0001>

<llo_original>
// kernel: tpu_custom_call.1
$region0: #{tpu_custom_call.1}
  #allocation0 [shape = 'u32[]', space=smem, size = 0x4, offset = 0x4, fixed_abs, tag = 'smem constant byte address 0x4 - core index']
  #allocation1 [shape = 'u32[144,128]{1,0:T(1,128)}', space=vmem, size = 0x12000, scoped, tag = 'internal scratch']
  %s0 = inlined_call_operand.hbm [shape: f32[8,128], index: 0, kind: input, shape index: {}]
  %s1 = inlined_call_operand.hbm [shape: f32[128,128], index: 1, kind: input, shape index: {}]
  %s2 = inlined_call_operand.vmem [shape: f32[32,39], index: 2, kind: input, shape index: {}]
  %s3 = inlined_call_operand.vmem [shape: f32[1,32], index: 3, kind: input, shape index: {}]
  %s4 = inlined_call_operand.vmem [shape: f32[1,32], index: 4, kind: input, shape index: {}]
  %s5 = inlined_call_operand.vmem [shape: f32[32,50], index: 5, kind: input, shape index: {}]
  %s6 = inlined_call_operand.vmem [shape: f32[1,50], index: 6, kind: input, shape index: {}]
  %s7 = inlined_call_operand.vmem [shape: f32[50,2], index: 7, kind: input, shape index: {}]
  %s8 = inlined_call_operand.vmem [shape: f32[1,2], index: 8, kind: input, shape index: {}]
  %s9 = inlined_call_operand.hbm [shape: f32[8,128], index: 9, kind: output, shape index: {}]
  %s10 = sld [smem:[#allocation0]]
  $region54: #{tpu_custom_call.1} parent=0
    _
  %s12 = ssub.s32 1, %s10
  %s13 = scalar_select 0, %s12, %s10
  $region1: #{tpu_custom_call.1} parent=0
    #allocation2 [shape = 'u8[4096]{0}', space=vmem, size = 0x1000, scoped, tag = 'input window, operand 0, single buffered']
    #allocation3 [shape = 's32[1]{0}', space=sflag, size = 0x4, scoped, tag = 'scoped memory for tpu_custom_call.1']
    #allocation4 [shape = 's32[1]{0}', space=sflag, size = 0x4, scoped, tag = 'scoped memory for tpu_custom_call.1']
    #allocation5 [shape = 'u8[65536]{0}', space=vmem, size = 0x10000, scoped, tag = 'input window, operand 1, single buffered']
    #allocation6 [shape = 's32[1]{0}', space=sflag, size = 0x4, scoped, tag = 'scoped memory for tpu_custom_call.1']
    #allocation7 [shape = 'u8[4096]{0}', space=vmem, size = 0x1000, scoped, tag = 'output window, operand 0, single buffered']
    %14 = vsyncpa [#allocation3], 0
    %15 = vsyncpa [#allocation6], 0
    %16 = vsyncpa [#allocation4], 0
    // Predicated region
    $region2: #{tpu_custom_call.1} parent=1 // pred_check
      _
    $region3: #{tpu_custom_call.1} parent=1 // pred_check_branch
      %18 = sbr.rel (0) target = $region5
    $region4: #{tpu_custom_call.1} parent=1 // pred_region
      %s20 = ssub.s32 128, 128
      %21 = vsyncadd [#allocation3], %s20
      %s23 = sshll.u32 [#allocation2], 4
      %s24 = int_to_ptr.vmem [resolvable:$true] %s23
      %26 = dma.hbm_to_vmem [thread:$0]  %s0, 128, %s24, [#allocation3]
    $region5: #{tpu_custom_call.1} parent=1 // pred_fallthru
      _
    // Predicated region
    $region6: #{tpu_custom_call.1} parent=1 // pred_check
      _
    $region7: #{tpu_custom_call.1} parent=1 // pred_check_branch
      %28 = sbr.rel (0) target = $region9
    $region8: #{tpu_custom_call.1} parent=1 // pred_region
      %s30 = ssub.s32 2048, 2048
      %31 = vsyncadd [#allocation6], %s30
      %s32 = sshll.u32 [#allocation5], 4
      %s33 = int_to_ptr.vmem [resolvable:$true] %s32
      %38 = dma.hbm_to_vmem [thread:$0]  %s1, 2048, %s33, [#allocation6], 128, 128, 8
    $region9: #{tpu_custom_call.1} parent=1 // pred_fallthru
      _
    // Predicated region
    $region10: #{tpu_custom_call.1} parent=1 // pred_check
      _
    $region11: #{tpu_custom_call.1} parent=1 // pred_check_branch
      %40 = sbr.rel (0) target = $region13
    $region12: #{tpu_custom_call.1} parent=1 // pred_region
      _
    $region13: #{tpu_custom_call.1} parent=1 // pred_fallthru
      _
    // Predicated region
    $region14: #{tpu_custom_call.1} parent=1 // pred_check
      _
    $region15: #{tpu_custom_call.1} parent=1 // pred_check_branch
      %42 = sbr.rel (0) target = $region17
    $region16: #{tpu_custom_call.1} parent=1 // pred_region
      _
    $region17: #{tpu_custom_call.1} parent=1 // pred_fallthru
      _
    // Predicated region
    $region18: #{tpu_custom_call.1} parent=1 // pred_check
      _
    $region19: #{tpu_custom_call.1} parent=1 // pred_check_branch
      %44 = sbr.rel (0) target = $region21
    $region20: #{tpu_custom_call.1} parent=1 // pred_region
      _
    $region21: #{tpu_custom_call.1} parent=1 // pred_fallthru
      _
    // Predicated region
    $region22: #{tpu_custom_call.1} parent=1 // pred_check
      _
    $region23: #{tpu_custom_call.1} parent=1 // pred_check_branch
      %46 = sbr.rel (0) target = $region25
    $region24: #{tpu_custom_call.1} parent=1 // pred_region
      _
    $region25: #{tpu_custom_call.1} parent=1 // pred_fallthru
      _
    // Predicated region
    $region26: #{tpu_custom_call.1} parent=1 // pred_check
      _
    $region27: #{tpu_custom_call.1} parent=1 // pred_check_branch
      %48 = sbr.rel (0) target = $region29
    $region28: #{tpu_custom_call.1} parent=1 // pred_region
      _
    $region29: #{tpu_custom_call.1} parent=1 // pred_fallthru
      _
    // Predicated region
    $region30: #{tpu_custom_call.1} parent=1 // pred_check
      _
    $region31: #{tpu_custom_call.1} parent=1 // pred_check_branch
      %50 = sbr.rel (0) target = $region33
    $region32: #{tpu_custom_call.1} parent=1 // pred_region
      _
    $region33: #{tpu_custom_call.1} parent=1 // pred_fallthru
      _
    // Predicated region
    $region34: #{tpu_custom_call.1} parent=1 // pred_check
      _
    $region35: #{tpu_custom_call.1} parent=1 // pred_check_branch
      %52 = sbr.rel (0) target = $region37
    $region36: #{tpu_custom_call.1} parent=1 // pred_region
      _
    $region37: #{tpu_custom_call.1} parent=1 // pred_fallthru
      _
    // Predicated region
    $region38: #{tpu_custom_call.1} parent=1 // pred_check
      _
    $region39: #{tpu_custom_call.1} parent=1 // pred_check_branch
      %54 = sbr.rel (0) target = $region41
    $region40: #{tpu_custom_call.1} parent=1 // pred_region
      %55 = dma.done [#allocation3], 128
    $region41: #{tpu_custom_call.1} parent=1 // pred_fallthru
      _
    // Predicated region
    $region42: #{tpu_custom_call.1} parent=1 // pred_check
      _
    $region43: #{tpu_custom_call.1} parent=1 // pred_check_branch
      %57 = sbr.rel (0) target = $region45
    $region44: #{tpu_custom_call.1} parent=1 // pred_region
      %58 = dma.done [#allocation6], 2048
    $region45: #{tpu_custom_call.1} parent=1 // pred_fallthru
      _
    %v59 = vld [vmem:[#allocation2] sm:$0xff]
    %v60 = vld [vmem:[#allocation5] sm:$0xff]
    %v61 = vld [vmem:[#allocation5 + $0x8] sm:$0xff]
    %v62 = vld [vmem:[#allocation5 + $0x10] sm:$0xff]
    %v63 = vld [vmem:[#allocation5 + $0x18] sm:$0xff]
    %v64 = vld [vmem:[#allocation5 + $0x20] sm:$0xff]
    %v65 = vld [vmem:[#allocation5 + $0x28] sm:$0xff]
    %v66 = vld [vmem:[#allocation5 + $0x30] sm:$0xff]
    %v67 = vld [vmem:[#allocation5 + $0x38] sm:$0xff]
    %v68 = vld [vmem:[#allocation5 + $0x40] sm:$0xff]
    %v69 = vld [vmem:[#allocation5 + $0x48] sm:$0xff]
    %v70 = vld [vmem:[#allocation5 + $0x50] sm:$0xff]
    %v71 = vld [vmem:[#allocation5 + $0x58] sm:$0xff]
    %v72 = vld [vmem:[#allocation5 + $0x60] sm:$0xff]
    %v73 = vld [vmem:[#allocation5 + $0x68] sm:$0xff]
    %v74 = vld [vmem:[#allocation5 + $0x70] sm:$0xff]
    %v75 = vld [vmem:[#allocation5 + $0x78] sm:$0xff]
    %76 = vmatprep.subr.mxu0 0.0
    %77 = vmatpush1.msra.mxu0 %v60
    %78 = vmatprep.subr.mxu0 0.0
    %79 = vmatpush1.msra.mxu0 %v61
    %80 = vmatprep.subr.mxu0 0.0
    %81 = vmatpush1.msra.mxu0 %v62
    %82 = vmatprep.subr.mxu0 0.0
    %83 = vmatpush1.msra.mxu0 %v63
    %84 = vmatprep.subr.mxu0 0.0
    %85 = vmatpush1.msra.mxu0 %v64
    %86 = vmatprep.subr.mxu0 0.0
    %87 = vmatpush1.msra.mxu0 %v65
    %88 = vmatprep.subr.mxu0 0.0
    %89 = vmatpush1.msra.mxu0 %v66
    %90 = vmatprep.subr.mxu0 0.0
    %91 = vmatpush1.msra.mxu0 %v67
    %92 = vmatprep.subr.mxu0 0.0
    %93 = vmatpush1.msra.mxu0 %v68
    %94 = vmatprep.subr.mxu0 0.0
    %95 = vmatpush1.msra.mxu0 %v69
    %96 = vmatprep.subr.mxu0 0.0
    %97 = vmatpush1.msra.mxu0 %v70
    %98 = vmatprep.subr.mxu0 0.0
    %99 = vmatpush1.msra.mxu0 %v71
    %100 = vmatprep.subr.mxu0 0.0
    %101 = vmatpush1.msra.mxu0 %v72
    %102 = vmatprep.subr.mxu0 0.0
    %103 = vmatpush1.msra.mxu0 %v73
    %104 = vmatprep.subr.mxu0 0.0
    %105 = vmatpush1.msra.mxu0 %v74
    %106 = vmatprep.subr.mxu0 0.0
    %107 = vmatpush1.msra.mxu0 %v75
    %108 = vmatprep.subr.mxu0 0.0
    %109 = vmatpush1.msra.mxu0 0.0
    %110 = vmatprep.subr.mxu0 0.0
    %111 = vmatpush1.msra.mxu0 0.0
    %112 = vmatprep.subr.mxu0 0.0
    %113 = vmatpush1.msra.mxu0 0.0
    %114 = vmatprep.subr.mxu0 0.0
    %115 = vmatpush1.msra.mxu0 0.0
    %116 = vmatprep.subr.mxu0 0.0
    %117 = vmatpush1.msra.mxu0 0.0
    %118 = vmatprep.subr.mxu0 0.0
    %119 = vmatpush1.msra.mxu0 0.0
    %120 = vmatprep.subr.mxu0 0.0
    %121 = vmatpush1.msra.mxu0 0.0
    %122 = vmatprep.subr.mxu0 0.0
    %123 = vmatpush1.msra.mxu0 0.0
    %124 = vmatprep.subr.mxu0 0.0
    %125 = vmatpush1.msra.mxu0 0.0
    %126 = vmatprep.subr.mxu0 0.0
    %127 = vmatpush1.msra.mxu0 0.0
    %128 = vmatprep.subr.mxu0 0.0
    %129 = vmatpush1.msra.mxu0 0.0
    %130 = vmatprep.subr.mxu0 0.0
    %131 = vmatpush1.msra.mxu0 0.0
    %132 = vmatprep.subr.mxu0 0.0
    %133 = vmatpush1.msra.mxu0 0.0
    %134 = vmatprep.subr.mxu0 0.0
    %135 = vmatpush1.msra.mxu0 0.0
    %136 = vmatprep.subr.mxu0 0.0
    %137 = vmatpush1.msra.mxu0 0.0
    %138 = vmatprep.subr.mxu0 0.0
    %139 = vmatpush1.msra.mxu0 0.0
    %140 = vmatprep.mubr.f32.mxu0 0.0
    %141 = vmatmul.mubr.f32.gmra.mrb[0].mxu0 %v59
    %v142 = vpop.f32.mrb[0].mxu0
    %v143 = vadd.f32 0.0, %v142
    %v144 = vpop.f32.mrb[0].mxu0
    %145 = vdwg.mxu0
    %v146 = vtanh.pop %v143
    %v147 = vmul.f32 %v146, %v146
    %vm148 = vcmask 261120
    %v149 = vsel %vm148, %v147, 0.0
    %150 = vadd.xlane.f32.xlu0 %v149
    %v151 = vpop.xlane.xlu0 %150
    %v152 = vmax.f32 %v151, 1e-24
    %v153 = vrsqrt.pop %v152
    %155 = vrot.lane.b32.xlu0 %v147, 96
    %v156 = vpop.permute.xlu0 %155
    %v158 = vsel %vm148, %v156, 0.0
    %159 = vadd.xlane.f32.xlu0 %v158
    %v160 = vpop.xlane.xlu0 %159
    %v161 = vmax.f32 %v160, 1e-24
    %v162 = vrsqrt.pop %v161
    %v163 = vmul.f32 %v146, %v153
    %v164 = vmul.f32 %v146, %v162
    %v165 = vld [vmem:[%s3] sm:$0x1]
    %167 = vset.pattern.permute.xlu0 72
    %168 = vperm.xlu0 %167, %v59
    %v169 = vpop.permute.xlu0 %168
    %v172 = vlaneseq
    %v173 = vshrl.u32 %v172, 7
    %v174 = vsub.s32 0, %v173
    %v175 = vrot.slane %v165, %v174
    %v177 = vmul.f32 %v169, %v175
    %v178 = vadd.f32 %v177, 1.0
    %v179 = vld [vmem:[%s4] sm:$0x1]
    %v181 = vlaneseq
    %v182 = vshrl.u32 %v181, 7
    %v183 = vsub.s32 0, %v182
    %v184 = vrot.slane %v179, %v183
    %v186 = vadd.f32 %v178, %v184
    %188 = vrot.lane.b32.xlu0 %v186, 32
    %v189 = vpop.permute.xlu0 %188
    %v191 = vmul.f32 %v59, %v189
    %v192 = vld [vmem:[%s2] sm:$0xff]
    %v193 = vld [vmem:[%s2 + $0x8] sm:$0xff]
    %v194 = vld [vmem:[%s2 + $0x10] sm:$0xff]
    %v195 = vld [vmem:[%s2 + $0x18] sm:$0xff]
    %197 = vrot.lane.b32.xlu0 %v191, 96
    %v198 = vpop.permute.xlu0 %197
    %v199 = vsel %vm148, %v198, 0
    %201 = vmatprep.subr.mxu0 0.0
    %202 = vmatpush1.msra.mxu0 %v192
    %203 = vmatprep.subr.mxu0 0.0
    %204 = vmatpush1.msra.mxu0 %v193
    %205 = vmatprep.subr.mxu0 0.0
    %206 = vmatpush1.msra.mxu0 %v194
    %207 = vmatprep.subr.mxu0 0.0
    %208 = vmatpush1.msra.mxu0 %v195
    %209 = vmatprep.subr.mxu0 0.0
    %210 = vmatpush1.msra.mxu0 0.0
    %211 = vmatprep.subr.mxu0 0.0
    %212 = vmatpush1.msra.mxu0 0.0
    %213 = vmatprep.subr.mxu0 0.0
    %214 = vmatpush1.msra.mxu0 0.0
    %215 = vmatprep.subr.mxu0 0.0
    %216 = vmatpush1.msra.mxu0 0.0
    %217 = vmatprep.subr.mxu0 0.0
    %218 = vmatpush1.msra.mxu0 0.0
    %219 = vmatprep.subr.mxu0 0.0
    %220 = vmatpush1.msra.mxu0 0.0
    %221 = vmatprep.subr.mxu0 0.0
    %222 = vmatpush1.msra.mxu0 0.0
    %223 = vmatprep.subr.mxu0 0.0
    %224 = vmatpush1.msra.mxu0 0.0
    %225 = vmatprep.subr.mxu0 0.0
    %226 = vmatpush1.msra.mxu0 0.0
    %227 = vmatprep.subr.mxu0 0.0
    %228 = vmatpush1.msra.mxu0 0.0
    %229 = vmatprep.subr.mxu0 0.0
    %230 = vmatpush1.msra.mxu0 0.0
    %231 = vmatprep.subr.mxu0 0.0
    %232 = vmatpush1.msra.mxu0 0.0
    %233 = vmatprep.subr.mxu0 0.0
    %234 = vmatpush1.msra.mxu0 0.0
    %235 = vmatprep.subr.mxu0 0.0
    %236 = vmatpush1.msra.mxu0 0.0
    %237 = vmatprep.subr.mxu0 0.0
    %238 = vmatpush1.msra.mxu0 0.0
    %239 = vmatprep.subr.mxu0 0.0
    %240 = vmatpush1.msra.mxu0 0.0
    %241 = vmatprep.subr.mxu0 0.0
    %242 = vmatpush1.msra.mxu0 0.0
    %243 = vmatprep.subr.mxu0 0.0
    %244 = vmatpush1.msra.mxu0 0.0
    %245 = vmatprep.subr.mxu0 0.0
    %246 = vmatpush1.msra.mxu0 0.0
    %247 = vmatprep.subr.mxu0 0.0
    %248 = vmatpush1.msra.mxu0 0.0
    %249 = vmatprep.subr.mxu0 0.0
    %250 = vmatpush1.msra.mxu0 0.0
    %251 = vmatprep.subr.mxu0 0.0
    %252 = vmatpush1.msra.mxu0 0.0
    %253 = vmatprep.subr.mxu0 0.0
    %254 = vmatpush1.msra.mxu0 0.0
    %255 = vmatprep.subr.mxu0 0.0
    %256 = vmatpush1.msra.mxu0 0.0
    %257 = vmatprep.subr.mxu0 0.0
    %258 = vmatpush1.msra.mxu0 0.0
    %259 = vmatprep.subr.mxu0 0.0
    %260 = vmatpush1.msra.mxu0 0.0
    %261 = vmatprep.subr.mxu0 0.0
    %262 = vmatpush1.msra.mxu0 0.0
    %263 = vmatprep.subr.mxu0 0.0
    %264 = vmatpush1.msra.mxu0 0.0
    %265 = vmatprep.mubr.f32.mxu0 0.0
    %266 = vmatmul.mubr.f32.gmra.mrb[0].mxu0 %v199
    %v267 = vpop.f32.mrb[0].mxu0
    %v268 = vadd.f32 0.0, %v267
    %v269 = vpop.f32.mrb[0].mxu0
    %270 = vdwg.mxu0
    %272 = vrot.lane.b32.xlu0 %v268, 64
    %v273 = vpop.permute.xlu0 %272
    %v275 = vadd.f32 %v143, %v273
    %v276 = vld [vmem:[%s5] sm:$0xff]
    %v277 = vld [vmem:[%s5 + $0x8] sm:$0xff]
    %v278 = vld [vmem:[%s5 + $0x10] sm:$0xff]
    %v279 = vld [vmem:[%s5 + $0x18] sm:$0xff]
    %v280 = vld [vmem:[%s6] sm:$0x1]
    %v282 = vlaneseq
    %v283 = vshrl.u32 %v282, 7
    %v284 = vsub.s32 0, %v283
    %v285 = vrot.slane %v280, %v284
    %v288 = vsel %vm148, %v163, 0
    %290 = vmatprep.subr.mxu0 0.0
    %291 = vmatpush1.msra.mxu0 %v276
    %292 = vmatprep.subr.mxu0 0.0
    %293 = vmatpush1.msra.mxu0 %v277
    %294 = vmatprep.subr.mxu0 0.0
    %295 = vmatpush1.msra.mxu0 %v278
    %296 = vmatprep.subr.mxu0 0.0
    %297 = vmatpush1.msra.mxu0 %v279
    %298 = vmatprep.subr.mxu0 0.0
    %299 = vmatpush1.msra.mxu0 0.0
    %300 = vmatprep.subr.mxu0 0.0
    %301 = vmatpush1.msra.mxu0 0.0
    %302 = vmatprep.subr.mxu0 0.0
    %303 = vmatpush1.msra.mxu0 0.0
    %304 = vmatprep.subr.mxu0 0.0
    %305 = vmatpush1.msra.mxu0 0.0
    %306 = vmatprep.subr.mxu0 0.0
    %307 = vmatpush1.msra.mxu0 0.0
    %308 = vmatprep.subr.mxu0 0.0
    %309 = vmatpush1.msra.mxu0 0.0
    %310 = vmatprep.subr.mxu0 0.0
    %311 = vmatpush1.msra.mxu0 0.0
    %312 = vmatprep.subr.mxu0 0.0
    %313 = vmatpush1.msra.mxu0 0.0
    %314 = vmatprep.subr.mxu0 0.0
    %315 = vmatpush1.msra.mxu0 0.0
    %316 = vmatprep.subr.mxu0 0.0
    %317 = vmatpush1.msra.mxu0 0.0
    %318 = vmatprep.subr.mxu0 0.0
    %319 = vmatpush1.msra.mxu0 0.0
    %320 = vmatprep.subr.mxu0 0.0
    %321 = vmatpush1.msra.mxu0 0.0
    %322 = vmatprep.subr.mxu0 0.0
    %323 = vmatpush1.msra.mxu0 0.0
    %324 = vmatprep.subr.mxu0 0.0
    %325 = vmatpush1.msra.mxu0 0.0
    %326 = vmatprep.subr.mxu0 0.0
    %327 = vmatpush1.msra.mxu0 0.0
    %328 = vmatprep.subr.mxu0 0.0
    %329 = vmatpush1.msra.mxu0 0.0
    %330 = vmatprep.subr.mxu0 0.0
    %331 = vmatpush1.msra.mxu0 0.0
    %332 = vmatprep.subr.mxu0 0.0
    %333 = vmatpush1.msra.mxu0 0.0
    %334 = vmatprep.subr.mxu0 0.0
    %335 = vmatpush1.msra.mxu0 0.0
    %336 = vmatprep.subr.mxu0 0.0
    %337 = vmatpush1.msra.mxu0 0.0
    %338 = vmatprep.subr.mxu0 0.0
    %339 = vmatpush1.msra.mxu0 0.0
    %340 = vmatprep.subr.mxu0 0.0
    %341 = vmatpush1.msra.mxu0 0.0
    %342 = vmatprep.subr.mxu0 0.0
    %343 = vmatpush1.msra.mxu0 0.0
    %344 = vmatprep.subr.mxu0 0.0
    %345 = vmatpush1.msra.mxu0 0.0
    %346 = vmatprep.subr.mxu0 0.0
    %347 = vmatpush1.msra.mxu0 0.0
    %348 = vmatprep.subr.mxu0 0.0
    %349 = vmatpush1.msra.mxu0 0.0
    %350 = vmatprep.subr.mxu0 0.0
    %351 = vmatpush1.msra.mxu0 0.0
    %352 = vmatprep.subr.mxu0 0.0
    %353 = vmatpush1.msra.mxu0 0.0
    %354 = vmatprep.mubr.f32.mxu0 0.0
    %355 = vmatmul.mubr.f32.gmra.mrb[0].mxu0 %v288
    %v356 = vpop.f32.mrb[0].mxu0
    %v357 = vadd.f32 %v285, %v356
    %v358 = vpop.f32.mrb[0].mxu0
    %359 = vdwg.mxu0
    %v360 = vmax.f32 %v357, 0.0
    %v361 = vld [vmem:[%s7] sm:$0xff]
    %v362 = vld [vmem:[%s7 + $0x8] sm:$0xff]
    %v363 = vld [vmem:[%s7 + $0x10] sm:$0xff]
    %v364 = vld [vmem:[%s7 + $0x18] sm:$0xff]
    %v365 = vld [vmem:[%s7 + $0x20] sm:$0xff]
    %v366 = vld [vmem:[%s7 + $0x28] sm:$0xff]
    %v367 = vld [vmem:[%s7 + $0x30] sm:$0x3]
    %v368 = vld [vmem:[%s8] sm:$0x1]
    %v370 = vlaneseq
    %v371 = vshrl.u32 %v370, 7
    %v372 = vsub.s32 0, %v371
    %v373 = vrot.slane %v368, %v372
    %vm375 = vcmask 408576
    %v377 = vsel %vm375, %v360, 0
    %vm379 = vcmask 1041408
    %v381 = vsel %vm379, %v367, 0
    %383 = vmatprep.subr.mxu0 0.0
    %384 = vmatpush1.msra.mxu0 %v361
    %385 = vmatprep.subr.mxu0 0.0
    %386 = vmatpush1.msra.mxu0 %v362
    %387 = vmatprep.subr.mxu0 0.0
    %388 = vmatpush1.msra.mxu0 %v363
    %389 = vmatprep.subr.mxu0 0.0
    %390 = vmatpush1.msra.mxu0 %v364
    %391 = vmatprep.subr.mxu0 0.0
    %392 = vmatpush1.msra.mxu0 %v365
    %393 = vmatprep.subr.mxu0 0.0
    %394 = vmatpush1.msra.mxu0 %v366
    %395 = vmatprep.subr.mxu0 0.0
    %396 = vmatpush1.msra.mxu0 %v381
    %397 = vmatprep.subr.mxu0 0.0
    %398 = vmatpush1.msra.mxu0 0.0
    %399 = vmatprep.subr.mxu0 0.0
    %400 = vmatpush1.msra.mxu0 0.0
    %401 = vmatprep.subr.mxu0 0.0
    %402 = vmatpush1.msra.mxu0 0.0
    %403 = vmatprep.subr.mxu0 0.0
    %404 = vmatpush1.msra.mxu0 0.0
    %405 = vmatprep.subr.mxu0 0.0
    %406 = vmatpush1.msra.mxu0 0.0
    %407 = vmatprep.subr.mxu0 0.0
    %408 = vmatpush1.msra.mxu0 0.0
    %409 = vmatprep.subr.mxu0 0.0
    %410 = vmatpush1.msra.mxu0 0.0
    %411 = vmatprep.subr.mxu0 0.0
    %412 = vmatpush1.msra.mxu0 0.0
    %413 = vmatprep.subr.mxu0 0.0
    %414 = vmatpush1.msra.mxu0 0.0
    %415 = vmatprep.subr.mxu0 0.0
    %416 = vmatpush1.msra.mxu0 0.0
    %417 = vmatprep.subr.mxu0 0.0
    %418 = vmatpush1.msra.mxu0 0.0
    %419 = vmatprep.subr.mxu0 0.0
    %420 = vmatpush1.msra.mxu0 0.0
    %421 = vmatprep.subr.mxu0 0.0
    %422 = vmatpush1.msra.mxu0 0.0
    %423 = vmatprep.subr.mxu0 0.0
    %424 = vmatpush1.msra.mxu0 0.0
    %425 = vmatprep.subr.mxu0 0.0
    %426 = vmatpush1.msra.mxu0 0.0
    %427 = vmatprep.subr.mxu0 0.0
    %428 = vmatpush1.msra.mxu0 0.0
    %429 = vmatprep.subr.mxu0 0.0
    %430 = vmatpush1.msra.mxu0 0.0
    %431 = vmatprep.subr.mxu0 0.0
    %432 = vmatpush1.msra.mxu0 0.0
    %433 = vmatprep.subr.mxu0 0.0
    %434 = vmatpush1.msra.mxu0 0.0
    %435 = vmatprep.subr.mxu0 0.0
    %436 = vmatpush1.msra.mxu0 0.0
    %437 = vmatprep.subr.mxu0 0.0
    %438 = vmatpush1.msra.mxu0 0.0
    %439 = vmatprep.subr.mxu0 0.0
    %440 = vmatpush1.msra.mxu0 0.0
    %441 = vmatprep.subr.mxu0 0.0
    %442 = vmatpush1.msra.mxu0 0.0
    %443 = vmatprep.subr.mxu0 0.0
    %444 = vmatpush1.msra.mxu0 0.0
    %445 = vmatprep.subr.mxu0 0.0
    %446 = vmatpush1.msra.mxu0 0.0
    %447 = vmatprep.mubr.f32.mxu0 0.0
    %448 = vmatmul.mubr.f32.gmra.mrb[0].mxu0 %v377
    %v449 = vpop.f32.mrb[0].mxu0
    %v450 = vadd.f32 %v373, %v449
    %v451 = vpop.f32.mrb[0].mxu0
    %452 = vdwg.mxu0
    %453 = vst.msk [vmem:[#allocation7] sm:$0xff] %vm148, %v163
    %vm454 = vcmask 523520
    %455 = vst.msk [vmem:[#allocation7] sm:$0xff] %vm454, %v164
    %vm456 = vcmask 843264
    %457 = vst.msk [vmem:[#allocation7] sm:$0xff] %vm456, %v275
    %459 = vrot.lane.b32.xlu0 %v450, 103
    %v460 = vpop.permute.xlu0 %459
    %vm462 = vcmask 859960
    %463 = vst.msk [vmem:[#allocation7] sm:$0xff] %vm462, %v460
    // Predicated region
    $region46: #{tpu_custom_call.1} parent=1 // pred_check
      _
    $region47: #{tpu_custom_call.1} parent=1 // pred_check_branch
      %465 = sbr.rel (0) target = $region49
    $region48: #{tpu_custom_call.1} parent=1 // pred_region
      %s467 = ssub.s32 128, 128
      %468 = vsyncadd [#allocation4], %s467
      %s470 = sshll.u32 [#allocation7], 4
      %s471 = int_to_ptr.vmem [resolvable:$true] %s470
      %473 = dma.vmem_to_hbm [thread:$0]  %s471, 128, %s9, [#allocation4]
    $region49: #{tpu_custom_call.1} parent=1 // pred_fallthru
      _
    // Predicated region
    $region50: #{tpu_custom_call.1} parent=1 // pred_check
      _
    $region51: #{tpu_custom_call.1} parent=1 // pred_check_branch
      %475 = sbr.rel (0) target = $region53
    $region52: #{tpu_custom_call.1} parent=1 // pred_region
      %476 = dma.done [#allocation4], 128
    $region53: #{tpu_custom_call.1} parent=1 // pred_fallthru
      _
    %477 = vsyncpa [#allocation3], 1
    %478 = vsyncpa [#allocation6], 1
    %479 = vsyncpa [#allocation4], 1

</llo_original>
